<compile_context>
chip_gen: v5e
topology: v5e:2x2
jax: 0.10.0
libtpu: 0.0.40
codegen_flags: <defaults>
</compile_context>

<pallas_src>
import jax
import jax.numpy as jnp
from jax.experimental import pallas as pl
from jax.experimental.pallas import tpu as pltpu

NEG_SLOPE = 0.01


def _lrelu(v):
    return jnp.where(v >= 0, v, NEG_SLOPE * v)


def _round_up(n, m):
    return ((n + m - 1) // m) * m


def sornn_kernel(xt_ref, wcat_ref, wvec_ref, wo_ref, c0_ref, o_ref):
    """One batch tile.  All arrays are 'transposed' (batch on the lane axis).

    xt_ref   : (D,  TB)  x^T tile                (compute dtype)
    wcat_ref : (K3, D)   zero-padded [W2;W3;W4]  (compute dtype, VMEM-resident)
    wvec_ref : (1,  K3)  folded second-stage+head weight
    wo_ref   : (1,  D)   output-head row
    c0_ref   : (1,)      scalar constant in SMEM
    o_ref    : (1,  TB)  sigmoid(out_4 @ Wout.T) for this tile (f32)
    """
    xt = xt_ref[...]                                              # (D, TB)

    # h^T = LReLU([W2;W3;W4]_pad @ x^T)  -> (K3, TB), f32 accumulation.
    h_t = _lrelu(jnp.dot(wcat_ref[...], xt,
                         preferred_element_type=jnp.float32))

    # y-term of the logits: wvec @ h^T -> (1, TB).
    yterm = jnp.dot(wvec_ref[...], h_t.astype(wvec_ref.dtype),
                    preferred_element_type=jnp.float32)

    # x-term of the logits: wo @ x^T -> (1, TB).
    xterm = jnp.dot(wo_ref[...], xt, preferred_element_type=jnp.float32)

    logits = xterm - yterm + c0_ref[0]                            # (1, TB) f32
    o_ref[...] = jax.nn.sigmoid(logits)


def sornn_forward(x, w1, b1, w2, w3, w4, w5, wo, *, tile_b=1024,
                  compute_dtype=jnp.bfloat16):
    """SORNN forward (eval-mode dropout) as one Pallas TPU kernel.

    w1 and w5 cancel algebraically and are ignored (kept for interface parity).
    """
    del w1, w5
    B, D = x.shape
    f32 = jnp.float32

    # ---------------- one-time host-side weight prep ----------------------
    K3 = _round_up(3 * D, 128)                       # lane/MXU-aligned concat dim
    wcat = jnp.concatenate([w2, w3, w4], axis=0).astype(f32)           # (3D, D)
    wcat_pad = jnp.pad(wcat, ((0, K3 - 3 * D), (0, 0)))                # (K3, D)

    wo_vec = wo.reshape(D).astype(f32)
    # Fold the {3,2,1} recurrence scales AND the output head:
    #   (3*y2 + 2*y3 + y4) @ wo == h @ ([3*W2.T; 2*W3.T; W4.T] @ wo) == h @ wvec
    w_second = jnp.concatenate(
        [3.0 * w2.T, 2.0 * w3.T, w4.T], axis=0).astype(f32)            # (3D, D)
    wvec = w_second @ wo_vec                                           # (3D,)
    wvec_pad = jnp.pad(wvec, (0, K3 - 3 * D)).reshape(1, K3)           # (1, K3)
    wo_row = wo_vec.reshape(1, D)

    # Constant term from out_1 = LReLU(-b1) + x:  c0 = 4 * LReLU(-b1) . wo
    c0 = 4.0 * jnp.sum(_lrelu(-b1.astype(f32)) * wo_vec)
    c0 = c0.reshape(1).astype(f32)

    # ---------------- batch tiling (batch lives on the lane axis) ---------
    if tile_b is None:
        tile_b = 1024                       # sweep 1024-4096 on v6e/v7x if needed
    if B <= tile_b:
        tile_b, b_pad = B, B                # single full-extent tile: always legal
    else:
        tile_b = _round_up(tile_b, 128)     # lane alignment for multi-tile grids
        b_pad = _round_up(B, tile_b)        # pad batch; extra rows sliced off below
    grid_b = b_pad // tile_b                # >= 2 for large B -> v7x megacore split

    x_t = jnp.pad(x.astype(f32).T, ((0, 0), (0, b_pad - B)))           # (D, b_pad)
    x_t = x_t.astype(compute_dtype)         # bf16 streaming halves HBM bytes
    wcat_pad = wcat_pad.astype(compute_dtype)
    wvec_pad = wvec_pad.astype(compute_dtype)
    wo_row = wo_row.astype(compute_dtype)

    out2d = pl.pallas_call(
        sornn_kernel,
        out_shape=jax.ShapeDtypeStruct((grid_b, tile_b), f32),
        grid=(grid_b,),
        in_specs=[
            # streamed x^T tile (only per-step DMA); bump to pl.Buffered(3)
            # only if a trace shows exposed DMA.
            pl.BlockSpec((D, tile_b), lambda i: (0, i)),
            # constant index_map -> weights stay VMEM-resident across steps.
            pl.BlockSpec((K3, D), lambda i: (0, 0)),
            pl.BlockSpec((1, K3), lambda i: (0, 0)),
            pl.BlockSpec((1, D), lambda i: (0, 0)),
            # scalar constant in SMEM.
            pl.BlockSpec(memory_space=pltpu.MemorySpace.SMEM),
        ],
        # lane-dense output: one contiguous (1, tile_b) row per grid step.
        out_specs=pl.BlockSpec((1, tile_b), lambda i: (i, 0)),
        compiler_params=pltpu.CompilerParams(
            dimension_semantics=("parallel",)),
    )(x_t, wcat_pad, wvec_pad, wo_row, c0)

    return out2d.reshape(-1)[:B].reshape(B, 1)


def _reference_forward(x, w1, b1, w2, w3, w4, w5, wo):
    """Faithful pure-JAX transcription of the PyTorch forward (dropout=identity)."""
    lrelu = lambda v: jnp.where(v >= 0, v, NEG_SLOPE * v)
    xw1t = x @ w1.T
    h1 = xw1t + b1
    out1 = lrelu(-h1 + xw1t) + x
    out2 = -(lrelu(x @ w2.T) @ w2.T) + 2 * out1 - x
    out3 = -(lrelu(x @ w3.T) @ w3.T) + 2 * out2 - out1
    out4 = -(lrelu(x @ w4.T) @ w4.T) + 2 * out3 - out2
    t = out4 @ w5.T
    out = lrelu(-t + t) + out4
    return jax.nn.sigmoid(out @ wo.T)


def _linear_init(key, out_f, in_f, with_bias=False):
    # deterministic torch-like init: U(-1/sqrt(fan_in), 1/sqrt(fan_in))
    bound = 1.0 / (in_f ** 0.5)
    kw, kb = jax.random.split(key)
    w = jax.random.uniform(kw, (out_f, in_f), jnp.float32, -bound, bound)
    if with_bias:
        b = jax.random.uniform(kb, (out_f,), jnp.float32, -bound, bound)
        return w, b
    return w


if __name__ == "__main__":
    B, D = 8, 32  # batch, input_size (small demo shapes)
    key = jax.random.PRNGKey(0)
    kx, k1, k2, k3, k4, k5, ko = jax.random.split(key, 7)

    x = jax.random.normal(kx, (B, D), jnp.float32)
    w1, b1 = _linear_init(k1, D, D, with_bias=True)
    w2 = _linear_init(k2, D, D)
    w3 = _linear_init(k3, D, D)
    w4 = _linear_init(k4, D, D)
    w5 = _linear_init(k5, 1, D)
    wo = _linear_init(ko, 1, D)

    ref = _reference_forward(x, w1, b1, w2, w3, w4, w5, wo)

    # f32 end-to-end path (tight check).
    out_f32 = jax.block_until_ready(
        sornn_forward(x, w1, b1, w2, w3, w4, w5, wo, compute_dtype=jnp.float32))
    assert out_f32.shape == (B, 1)
    assert jnp.allclose(out_f32, ref, atol=5e-3, rtol=5e-3), "f32 kernel mismatch"

    # bf16 MXU-input fast path (f32 accumulation; looser tolerance for bf16 inputs).
    out_bf16 = jax.block_until_ready(
        sornn_forward(x, w1, b1, w2, w3, w4, w5, wo, compute_dtype=jnp.bfloat16))
    assert out_bf16.shape == (B, 1)
    assert jnp.allclose(out_bf16, ref, atol=2e-2, rtol=2e-2), "bf16 kernel mismatch"

    print("KERNEL_OK")
</pallas_src>

<mosaic_0001>
module attributes {stable_mosaic.version = 11 : i64} {
  func.func @sornn_kernel(%arg0: i32, %arg1: memref<32x8xf32, #tpu.memory_space<vmem>>, %arg2: memref<128x32xf32, #tpu.memory_space<vmem>>, %arg3: memref<1x128xf32, #tpu.memory_space<vmem>>, %arg4: memref<1x32xf32, #tpu.memory_space<vmem>>, %arg5: memref<1xf32, #tpu.memory_space<smem>>, %arg6: memref<1x8xf32, #tpu.memory_space<vmem>>) attributes {dimension_semantics = [#tpu.dimension_semantics<parallel>], iteration_bounds = array<i64: 1>, scalar_prefetch = 0 : i64, scratch_operands = 0 : i64, tpu.core_type = #tpu.core_type<tc>, window_params = [{transform_indices = @transform_0, window_bounds = array<i64: 32, 8>}, {pipeline_mode = #tpu.pipeline_mode<synchronous>, transform_indices = @transform_1, window_bounds = array<i64: 128, 32>}, {pipeline_mode = #tpu.pipeline_mode<synchronous>, transform_indices = @transform_2, window_bounds = array<i64: 1, 128>}, {pipeline_mode = #tpu.pipeline_mode<synchronous>, transform_indices = @transform_3, window_bounds = array<i64: 1, 32>}, {transform_indices = @transform_4, window_bounds = array<i64: 1>}, {transform_indices = @transform_5, window_bounds = array<i64: 1, 8>}]} {
    %c0 = arith.constant 0 : index
    %c0_0 = arith.constant 0 : index
    %0 = vector.load %arg1[%c0, %c0_0] : memref<32x8xf32, #tpu.memory_space<vmem>>, vector<32x8xf32>
    %c0_1 = arith.constant 0 : index
    %c0_2 = arith.constant 0 : index
    %1 = vector.load %arg2[%c0_1, %c0_2] : memref<128x32xf32, #tpu.memory_space<vmem>>, vector<128x32xf32>
    %cst = arith.constant dense<0.000000e+00> : vector<128x8xf32>
    %2 = tpu.matmul %1, %0, %cst {dimension_numbers = #tpu.dot_dimension_numbers<[1], [0], [0], [1], [0, 0, 1, 1], [], []>} : vector<128x32xf32>, vector<32x8xf32>, vector<128x8xf32> -> vector<128x8xf32>
    %cst_3 = arith.constant 0.000000e+00 : f32
    %3 = vector.broadcast %cst_3 : f32 to vector<128x8xf32>
    %4 = arith.cmpf oge, %2, %3 : vector<128x8xf32>
    %cst_4 = arith.constant 0.00999999977 : f32
    %5 = vector.broadcast %cst_4 : f32 to vector<128x8xf32>
    %6 = arith.mulf %5, %2 : vector<128x8xf32>
    %7 = arith.select %4, %2, %6 : vector<128x8xi1>, vector<128x8xf32>
    %c0_5 = arith.constant 0 : index
    %c0_6 = arith.constant 0 : index
    %8 = vector.load %arg3[%c0_5, %c0_6] : memref<1x128xf32, #tpu.memory_space<vmem>>, vector<1x128xf32>
    %cst_7 = arith.constant dense<0.000000e+00> : vector<1x8xf32>
    %9 = tpu.matmul %8, %7, %cst_7 {dimension_numbers = #tpu.dot_dimension_numbers<[1], [0], [0], [1], [0, 0, 1, 1], [], []>} : vector<1x128xf32>, vector<128x8xf32>, vector<1x8xf32> -> vector<1x8xf32>
    %c0_8 = arith.constant 0 : index
    %c0_9 = arith.constant 0 : index
    %10 = vector.load %arg4[%c0_8, %c0_9] : memref<1x32xf32, #tpu.memory_space<vmem>>, vector<1x32xf32>
    %cst_10 = arith.constant dense<0.000000e+00> : vector<1x8xf32>
    %11 = tpu.matmul %10, %0, %cst_10 {dimension_numbers = #tpu.dot_dimension_numbers<[1], [0], [0], [1], [0, 0, 1, 1], [], []>} : vector<1x32xf32>, vector<32x8xf32>, vector<1x8xf32> -> vector<1x8xf32>
    %12 = arith.subf %11, %9 : vector<1x8xf32>
    %c0_11 = arith.constant 0 : index
    %13 = memref.load %arg5[%c0_11] : memref<1xf32, #tpu.memory_space<smem>>
    %14 = vector.broadcast %13 : f32 to vector<1x8xf32>
    %15 = arith.addf %12, %14 : vector<1x8xf32>
    %16 = arith.negf %15 : vector<1x8xf32>
    %17 = math.exp %16 : vector<1x8xf32>
    %cst_12 = arith.constant 1.000000e+00 : f32
    %18 = vector.broadcast %cst_12 : f32 to vector<1x8xf32>
    %19 = arith.addf %18, %17 : vector<1x8xf32>
    %20 = arith.divf %18, %19 : vector<1x8xf32>
    %c0_13 = arith.constant 0 : index
    %c0_14 = arith.constant 0 : index
    %21 = vector.load %arg6[%c0_13, %c0_14] : memref<1x8xf32, #tpu.memory_space<vmem>>, vector<1x8xf32>
    tpu.vector_store %arg6[%c0_13, %c0_14], %20 {strides = array<i32>} : memref<1x8xf32, #tpu.memory_space<vmem>>, vector<1x8xf32>,
    return
  }
  func.func @transform_0(%arg0: i32) -> (i32, i32) {
    %c0_i32 = arith.constant 0 : i32
    %c0_i32_0 = arith.constant 0 : i32
    return %c0_i32, %arg0 : i32, i32
  }
  func.func @transform_1(%arg0: i32) -> (i32, i32) {
    %c0_i32 = arith.constant 0 : i32
    %c0_i32_0 = arith.constant 0 : i32
    %c0_i32_1 = arith.constant 0 : i32
    return %c0_i32, %c0_i32_0 : i32, i32
  }
  func.func @transform_2(%arg0: i32) -> (i32, i32) {
    %c0_i32 = arith.constant 0 : i32
    %c0_i32_0 = arith.constant 0 : i32
    %c0_i32_1 = arith.constant 0 : i32
    return %c0_i32, %c0_i32_0 : i32, i32
  }
  func.func @transform_3(%arg0: i32) -> (i32, i32) {
    %c0_i32 = arith.constant 0 : i32
    %c0_i32_0 = arith.constant 0 : i32
    %c0_i32_1 = arith.constant 0 : i32
    return %c0_i32, %c0_i32_0 : i32, i32
  }
  func.func @transform_4(%arg0: i32) -> i32 {
    %c0_i32 = arith.constant 0 : i32
    %c0_i32_0 = arith.constant 0 : i32
    return %c0_i32 : i32
  }
  func.func @transform_5(%arg0: i32) -> (i32, i32) {
    %c0_i32 = arith.constant 0 : i32
    %c0_i32_0 = arith.constant 0 : i32
    return %arg0, %c0_i32 : i32, i32
  }
}

</mosaic_0001>

<llo_original>
// kernel: tpu_custom_call.1
$region0: #{tpu_custom_call.1}
  #allocation0 [shape = 'u32[]', space=smem, size = 0x4, offset = 0x4, fixed_abs, tag = 'smem constant byte address 0x4 - core index']
  #allocation1 [shape = 'u32[72,128]{1,0:T(1,128)}', space=vmem, size = 0x9000, scoped, tag = 'internal scratch']
  #allocation2 [shape = 'f32[1]{0:T(128)S(6)}', space=smem, size = 0x200, scoped, tag = 'scoped memory for tpu_custom_call.1']
  %s0 = inlined_call_operand.vmem [shape: f32[32,8], index: 0, kind: input, shape index: {}]
  %s1 = inlined_call_operand.vmem [shape: f32[128,32], index: 1, kind: input, shape index: {}]
  %s2 = inlined_call_operand.vmem [shape: f32[1,128], index: 2, kind: input, shape index: {}]
  %s3 = inlined_call_operand.vmem [shape: f32[1,32], index: 3, kind: input, shape index: {}]
  %s4 = inlined_call_operand.<no memory space> [shape: f32[1], index: 4, kind: input, shape index: {}]
  %s5 = inlined_call_operand.hbm [shape: f32[1,8], index: 5, kind: output, shape index: {}]
  %s6 = sld [smem:[#allocation0]]
  $region30: #{tpu_custom_call.1} parent=0
    _
  %s8 = ssub.s32 1, %s6
  %s9 = scalar_select 0, %s8, %s6
  %10 = sst [smem:[#allocation2]] %s4
  $region1: #{tpu_custom_call.1} parent=0
    #allocation3 [shape = 'u8[512]{0}', space=vmem, size = 0x400, scoped, tag = 'output window, operand 0, single buffered']
    #allocation4 [shape = 's32[1]{0}', space=sflag, size = 0x4, scoped, tag = 'scoped memory for tpu_custom_call.1']
    %11 = vsyncpa [#allocation4], 0
    // Predicated region
    $region2: #{tpu_custom_call.1} parent=1 // pred_check
      _
    $region3: #{tpu_custom_call.1} parent=1 // pred_check_branch
      %13 = sbr.rel (0) target = $region5
    $region4: #{tpu_custom_call.1} parent=1 // pred_region
      _
    $region5: #{tpu_custom_call.1} parent=1 // pred_fallthru
      _
    // Predicated region
    $region6: #{tpu_custom_call.1} parent=1 // pred_check
      _
    $region7: #{tpu_custom_call.1} parent=1 // pred_check_branch
      %15 = sbr.rel (0) target = $region9
    $region8: #{tpu_custom_call.1} parent=1 // pred_region
      _
    $region9: #{tpu_custom_call.1} parent=1 // pred_fallthru
      _
    // Predicated region
    $region10: #{tpu_custom_call.1} parent=1 // pred_check
      _
    $region11: #{tpu_custom_call.1} parent=1 // pred_check_branch
      %17 = sbr.rel (0) target = $region13
    $region12: #{tpu_custom_call.1} parent=1 // pred_region
      _
    $region13: #{tpu_custom_call.1} parent=1 // pred_fallthru
      _
    // Predicated region
    $region14: #{tpu_custom_call.1} parent=1 // pred_check
      _
    $region15: #{tpu_custom_call.1} parent=1 // pred_check_branch
      %19 = sbr.rel (0) target = $region17
    $region16: #{tpu_custom_call.1} parent=1 // pred_region
      _
    $region17: #{tpu_custom_call.1} parent=1 // pred_fallthru
      _
    // Predicated region
    $region18: #{tpu_custom_call.1} parent=1 // pred_check
      _
    $region19: #{tpu_custom_call.1} parent=1 // pred_check_branch
      %21 = sbr.rel (0) target = $region21
    $region20: #{tpu_custom_call.1} parent=1 // pred_region
      _
    $region21: #{tpu_custom_call.1} parent=1 // pred_fallthru
      _
    %v22 = vld [vmem:[%s0] sm:$0xff]
    %v23 = vld [vmem:[%s0 + $0x8] sm:$0xff]
    %v24 = vld [vmem:[%s0 + $0x10] sm:$0xff]
    %v25 = vld [vmem:[%s0 + $0x18] sm:$0xff]
    %v26 = vld [vmem:[%s1] sm:$0xff]
    %v27 = vld [vmem:[%s1 + $0x8] sm:$0xff]
    %v28 = vld [vmem:[%s1 + $0x10] sm:$0xff]
    %v29 = vld [vmem:[%s1 + $0x18] sm:$0xff]
    %v30 = vld [vmem:[%s1 + $0x20] sm:$0xff]
    %v31 = vld [vmem:[%s1 + $0x28] sm:$0xff]
    %v32 = vld [vmem:[%s1 + $0x30] sm:$0xff]
    %v33 = vld [vmem:[%s1 + $0x38] sm:$0xff]
    %v34 = vld [vmem:[%s1 + $0x40] sm:$0xff]
    %v35 = vld [vmem:[%s1 + $0x48] sm:$0xff]
    %v36 = vld [vmem:[%s1 + $0x50] sm:$0xff]
    %v37 = vld [vmem:[%s1 + $0x58] sm:$0xff]
    %v38 = vld [vmem:[%s1 + $0x60] sm:$0xff]
    %v39 = vld [vmem:[%s1 + $0x68] sm:$0xff]
    %v40 = vld [vmem:[%s1 + $0x70] sm:$0xff]
    %v41 = vld [vmem:[%s1 + $0x78] sm:$0xff]
    %vm42 = vcmask 261120
    %v44 = vsel %vm42, %v26, 0
    %v47 = vsel %vm42, %v27, 0
    %v50 = vsel %vm42, %v28, 0
    %v53 = vsel %vm42, %v29, 0
    %v56 = vsel %vm42, %v30, 0
    %v59 = vsel %vm42, %v31, 0
    %v62 = vsel %vm42, %v32, 0
    %v65 = vsel %vm42, %v33, 0
    %v68 = vsel %vm42, %v34, 0
    %v71 = vsel %vm42, %v35, 0
    %v74 = vsel %vm42, %v36, 0
    %v77 = vsel %vm42, %v37, 0
    %v80 = vsel %vm42, %v38, 0
    %v83 = vsel %vm42, %v39, 0
    %v86 = vsel %vm42, %v40, 0
    %v89 = vsel %vm42, %v41, 0
    %91 = vmatpush.msra.mxu0 0.0
    %92 = vmatpush.msra.mxu0 0.0
    %93 = vmatpush.msra.mxu0 0.0
    %94 = vmatpush.msra.mxu0 0.0
    %95 = vmatpush.msra.mxu0 0.0
    %96 = vmatpush.msra.mxu0 0.0
    %97 = vmatpush.msra.mxu0 0.0
    %98 = vmatpush.msra.mxu0 0.0
    %99 = vmatpush.msra.mxu0 0.0
    %100 = vmatpush.msra.mxu0 0.0
    %101 = vmatpush.msra.mxu0 0.0
    %102 = vmatpush.msra.mxu0 0.0
    %103 = vmatpush.msra.mxu0 %v25
    %104 = vmatpush.msra.mxu0 %v24
    %105 = vmatpush.msra.mxu0 %v23
    %106 = vmatpush.msra.mxu0 %v22
    %107 = vmatmul.f32.gmra.mxu0 %v44
    %v108 = vpop.f32.mrf.mxu0
    %v109 = vadd.f32 0.0, %v108
    %110 = vmatmul.f32.gmra.mxu0 %v47
    %v111 = vpop.f32.mrf.mxu0
    %v112 = vadd.f32 0.0, %v111
    %113 = vmatmul.f32.gmra.mxu0 %v50
    %v114 = vpop.f32.mrf.mxu0
    %v115 = vadd.f32 0.0, %v114
    %116 = vmatmul.f32.gmra.mxu0 %v53
    %v117 = vpop.f32.mrf.mxu0
    %v118 = vadd.f32 0.0, %v117
    %119 = vmatmul.f32.gmra.mxu0 %v56
    %v120 = vpop.f32.mrf.mxu0
    %v121 = vadd.f32 0.0, %v120
    %122 = vmatmul.f32.gmra.mxu0 %v59
    %v123 = vpop.f32.mrf.mxu0
    %v124 = vadd.f32 0.0, %v123
    %125 = vmatmul.f32.gmra.mxu0 %v62
    %v126 = vpop.f32.mrf.mxu0
    %v127 = vadd.f32 0.0, %v126
    %128 = vmatmul.f32.gmra.mxu0 %v65
    %v129 = vpop.f32.mrf.mxu0
    %v130 = vadd.f32 0.0, %v129
    %131 = vmatmul.f32.gmra.mxu0 %v68
    %v132 = vpop.f32.mrf.mxu0
    %v133 = vadd.f32 0.0, %v132
    %134 = vmatmul.f32.gmra.mxu0 %v71
    %v135 = vpop.f32.mrf.mxu0
    %v136 = vadd.f32 0.0, %v135
    %137 = vmatmul.f32.gmra.mxu0 %v74
    %v138 = vpop.f32.mrf.mxu0
    %v139 = vadd.f32 0.0, %v138
    %140 = vmatmul.f32.gmra.mxu0 %v77
    %v141 = vpop.f32.mrf.mxu0
    %v142 = vadd.f32 0.0, %v141
    %143 = vmatmul.f32.gmra.mxu0 %v80
    %v144 = vpop.f32.mrf.mxu0
    %v145 = vadd.f32 0.0, %v144
    %146 = vmatmul.f32.gmra.mxu0 %v83
    %v147 = vpop.f32.mrf.mxu0
    %v148 = vadd.f32 0.0, %v147
    %149 = vmatmul.f32.gmra.mxu0 %v86
    %v150 = vpop.f32.mrf.mxu0
    %v151 = vadd.f32 0.0, %v150
    %152 = vmatmul.f32.gmra.mxu0 %v89
    %v153 = vpop.f32.mrf.mxu0
    %v154 = vadd.f32 0.0, %v153
    %155 = vdwg.mxu0
    %vm156 = vcmp.ge.f32.partialorder %v109, 0.0
    %vm157 = vcmp.ge.f32.partialorder %v112, 0.0
    %vm158 = vcmp.ge.f32.partialorder %v115, 0.0
    %vm159 = vcmp.ge.f32.partialorder %v118, 0.0
    %vm160 = vcmp.ge.f32.partialorder %v121, 0.0
    %vm161 = vcmp.ge.f32.partialorder %v124, 0.0
    %vm162 = vcmp.ge.f32.partialorder %v127, 0.0
    %vm163 = vcmp.ge.f32.partialorder %v130, 0.0
    %vm164 = vcmp.ge.f32.partialorder %v133, 0.0
    %vm165 = vcmp.ge.f32.partialorder %v136, 0.0
    %vm166 = vcmp.ge.f32.partialorder %v139, 0.0
    %vm167 = vcmp.ge.f32.partialorder %v142, 0.0
    %vm168 = vcmp.ge.f32.partialorder %v145, 0.0
    %vm169 = vcmp.ge.f32.partialorder %v148, 0.0
    %vm170 = vcmp.ge.f32.partialorder %v151, 0.0
    %vm171 = vcmp.ge.f32.partialorder %v154, 0.0
    %v172 = vmul.f32 %v109, 0.01
    %v173 = vmul.f32 %v112, 0.01
    %v174 = vmul.f32 %v115, 0.01
    %v175 = vmul.f32 %v118, 0.01
    %v176 = vmul.f32 %v121, 0.01
    %v177 = vmul.f32 %v124, 0.01
    %v178 = vmul.f32 %v127, 0.01
    %v179 = vmul.f32 %v130, 0.01
    %v180 = vmul.f32 %v133, 0.01
    %v181 = vmul.f32 %v136, 0.01
    %v182 = vmul.f32 %v139, 0.01
    %v183 = vmul.f32 %v142, 0.01
    %v184 = vmul.f32 %v145, 0.01
    %v185 = vmul.f32 %v148, 0.01
    %v186 = vmul.f32 %v151, 0.01
    %v187 = vmul.f32 %v154, 0.01
    %v188 = vsel %vm156, %v109, %v172
    %v189 = vsel %vm157, %v112, %v173
    %v190 = vsel %vm158, %v115, %v174
    %v191 = vsel %vm159, %v118, %v175
    %v192 = vsel %vm160, %v121, %v176
    %v193 = vsel %vm161, %v124, %v177
    %v194 = vsel %vm162, %v127, %v178
    %v195 = vsel %vm163, %v130, %v179
    %v196 = vsel %vm164, %v133, %v180
    %v197 = vsel %vm165, %v136, %v181
    %v198 = vsel %vm166, %v139, %v182
    %v199 = vsel %vm167, %v142, %v183
    %v200 = vsel %vm168, %v145, %v184
    %v201 = vsel %vm169, %v148, %v185
    %v202 = vsel %vm170, %v151, %v186
    %v203 = vsel %vm171, %v154, %v187
    %v204 = vld [vmem:[%s2] sm:$0x1]
    %205 = vmatpush.msra.mxu0 %v203
    %206 = vmatpush.msra.mxu0 %v202
    %207 = vmatpush.msra.mxu0 %v201
    %208 = vmatpush.msra.mxu0 %v200
    %209 = vmatpush.msra.mxu0 %v199
    %210 = vmatpush.msra.mxu0 %v198
    %211 = vmatpush.msra.mxu0 %v197
    %212 = vmatpush.msra.mxu0 %v196
    %213 = vmatpush.msra.mxu0 %v195
    %214 = vmatpush.msra.mxu0 %v194
    %215 = vmatpush.msra.mxu0 %v193
    %216 = vmatpush.msra.mxu0 %v192
    %217 = vmatpush.msra.mxu0 %v191
    %218 = vmatpush.msra.mxu0 %v190
    %219 = vmatpush.msra.mxu0 %v189
    %220 = vmatpush.msra.mxu0 %v188
    %221 = vmatmul.f32.gmra.mxu0 %v204
    %v222 = vpop.f32.mrf.mxu0
    %v223 = vadd.f32 0.0, %v222
    %224 = vdwg.mxu0
    %v225 = vld [vmem:[%s3] sm:$0x1]
    %v227 = vsel %vm42, %v225, 0
    %229 = vmatpush.msra.mxu0 0.0
    %230 = vmatpush.msra.mxu0 0.0
    %231 = vmatpush.msra.mxu0 0.0
    %232 = vmatpush.msra.mxu0 0.0
    %233 = vmatpush.msra.mxu0 0.0
    %234 = vmatpush.msra.mxu0 0.0
    %235 = vmatpush.msra.mxu0 0.0
    %236 = vmatpush.msra.mxu0 0.0
    %237 = vmatpush.msra.mxu0 0.0
    %238 = vmatpush.msra.mxu0 0.0
    %239 = vmatpush.msra.mxu0 0.0
    %240 = vmatpush.msra.mxu0 0.0
    %241 = vmatpush.msra.mxu0 %v25
    %242 = vmatpush.msra.mxu0 %v24
    %243 = vmatpush.msra.mxu0 %v23
    %244 = vmatpush.msra.mxu0 %v22
    %245 = vmatmul.f32.gmra.mxu0 %v227
    %v246 = vpop.f32.mrf.mxu0
    %v247 = vadd.f32 0.0, %v246
    %248 = vdwg.mxu0
    %v249 = vsub.f32 %v247, %v223
    %s250 = sld [smem:[#allocation2]]
    %v251 = vstv %s250
    %v252 = vadd.f32 %v249, %v251
    %v253 = vxor.u32 %v252, 2147483648
    %v254 = vmul.f32 %v253, 1.442695
    %v255 = vpow.pop %v254
    %v256 = vadd.f32 %v255, 1.0
    %v257 = vrcp.pop %v256
    %v258 = vmul.f32 %v256, %v257
    %v259 = vsub.f32 1.0, %v258
    %v260 = vmul.f32 %v257, %v259
    %v261 = vadd.f32 %v257, %v260
    %vm262 = vweird.f32 %v256
    %vm263 = vweird.f32 %v257
    %vm264 = vmor %vm262, %vm263
    %v265 = vsel %vm264, %v257, %v261
    %v266 = vand.u32 2147483647, %v256
    %vm267 = vcmp.eq.f32.partialorder %v266, 8.507059e+37
    %v268 = vand.u32 %v256, 2147483648
    %v269 = vor.u32 1.1754944e-38, %v268
    %v270 = vsel %vm267, %v269, %v265
    %v271 = vmul.f32 1.0, %v270
    %vm272 = vcmask 57344
    %273 = vst.msk [vmem:[#allocation3] sm:$0x1] %vm272, %v271
    // Predicated region
    $region22: #{tpu_custom_call.1} parent=1 // pred_check
      _
    $region23: #{tpu_custom_call.1} parent=1 // pred_check_branch
      %275 = sbr.rel (0) target = $region25
    $region24: #{tpu_custom_call.1} parent=1 // pred_region
      %277 = vsyncadd [#allocation4], 0
      %s279 = sshll.u32 [#allocation3], 4
      %s280 = int_to_ptr.vmem [resolvable:$true] %s279
      %s281 = sshll.u32 %s5, 4
      %s282 = int_to_ptr.hbm [resolvable:$true] %s281
      %284 = dma.vmem_to_hbm [thread:$0]  %s280, 16, %s282, [#allocation4]
    $region25: #{tpu_custom_call.1} parent=1 // pred_fallthru
      _
    // Predicated region
    $region26: #{tpu_custom_call.1} parent=1 // pred_check
      _
    $region27: #{tpu_custom_call.1} parent=1 // pred_check_branch
      %286 = sbr.rel (0) target = $region29
    $region28: #{tpu_custom_call.1} parent=1 // pred_region
      %288 = dma.done [#allocation4], 16
    $region29: #{tpu_custom_call.1} parent=1 // pred_fallthru
      _
    %289 = vsyncpa [#allocation4], 1

</llo_original>
